<compile_context>
chip_gen: v6e
topology: v6e:2x2x1
jax: 0.10.0
libtpu: 0.0.40
codegen_flags: <defaults>
</compile_context>

<pallas_src>
import jax
import jax.numpy as jnp
from jax.experimental import pallas as pl
from jax.experimental.pallas import tpu as pltpu


def _make_kernel(use_mxu_small_dots: bool):
    """Fused forward kernel, batch-on-lanes layout ([features, tile_b])."""

    def kernel(x_ref, w1_ref, b1_ref, w2_ref, b2_ref, w3_ref, w3t_ref, b3_ref,
               o_ref):
        x = x_ref[...]                                    # [2, TB]
        w1 = w1_ref[...]                                  # [16, 2]

        # ---- Layer 1: Linear(2, 16) + ReLU --------------------------------
        if use_mxu_small_dots:
            h1 = jnp.dot(w1, x, preferred_element_type=jnp.float32)
        else:
            # K=2 contraction as two broadcast FMAs on the VPU (fallback).
            h1 = w1[:, 0:1] * x[0:1, :] + w1[:, 1:2] * x[1:2, :]
        h1 = jnp.maximum(h1 + b1_ref[...], 0.0)           # [16, TB]

        # ---- Layer 2: Linear(16, 16) + ReLU (always MXU) -------------------
        h2 = jnp.dot(w2_ref[...], h1, preferred_element_type=jnp.float32)
        h2 = jnp.maximum(h2 + b2_ref[...], 0.0)           # [16, TB]

        # ---- Layer 3: Linear(16, 1) + Sigmoid -------------------------------
        if use_mxu_small_dots:
            h3 = jnp.dot(w3t_ref[...], h2, preferred_element_type=jnp.float32)
        else:
            # Scaled-row sum: VPU multiply + sublane reduce (XLU) fallback.
            h3 = jnp.sum(w3_ref[...] * h2, axis=0, keepdims=True)
        h3 = h3 + b3_ref[...]                             # [1, TB]

        # Sigmoid: exp on the EUP, exact reciprocal (keeps 1e-5 accuracy).
        o_ref[...] = pl.reciprocal(1.0 + jnp.exp(-h3)).astype(o_ref.dtype)

    return kernel


_KERNEL_MXU = _make_kernel(True)
_KERNEL_VPU = _make_kernel(False)
_MXU_SMALL_DOTS_OK = None        # resolved on first call (lowering probe)


def _round_up(v, m):
    return ((v + m - 1) // m) * m


def _pick_tile_b(batch, requested):
    """Lane-multiple tile; keep the grid >= ~4 steps when the batch allows."""
    req = max(128, _round_up(int(requested), 128))          # multiple of 128
    b128 = _round_up(max(int(batch), 1), 128)
    cap = max(128, (b128 // 4) // 128 * 128)                # >= ~4 grid steps
    return min(req, cap)


def frontline_nn(x, params, *, tile_b=32768, feature_major=False):
    """Fused forward pass of FrontlineNN.

    x: [B, 2] float32 (or [2, B] if feature_major=True, skipping the transpose)
    params: dict with w1[2,16], b1[1,16], w2[16,16], b2[1,16], w3[16,1], b3[1,1]
            stored [in, out] / [1, out], i.e. y = x @ W + b like nn.Linear.
    returns: [B, 1] float32
    """
    global _MXU_SMALL_DOTS_OK

    x_fm = x.astype(jnp.float32) if feature_major else x.astype(jnp.float32).T
    B = x_fm.shape[1]

    tb = _pick_tile_b(B, tile_b)
    b_pad = _round_up(B, tb)

    # Batch-on-lanes layout: single pad op (tail lanes zero-filled).
    x_t = jnp.pad(x_fm, ((0, 0), (0, b_pad - B)))

    # Tiny one-off transposes into the kernel's feature-major layout.
    w1 = params["w1"].T.astype(jnp.float32)        # [16, 2]
    b1 = params["b1"].T.astype(jnp.float32)        # [16, 1]
    w2 = params["w2"].T.astype(jnp.float32)        # [16, 16]  (h2 = w2 @ h1)
    b2 = params["b2"].T.astype(jnp.float32)        # [16, 1]
    w3 = params["w3"].astype(jnp.float32)          # [16, 1]   (VPU fallback)
    w3t = params["w3"].T.astype(jnp.float32)       # [1, 16]   (MXU path)
    b3 = params["b3"].astype(jnp.float32)          # [1, 1]

    grid = (b_pad // tb,)

    def const(shape):
        # Constant block index -> weights DMA'd to VMEM once, resident after.
        return pl.BlockSpec(shape, lambda i: (0, 0))

    def run(kernel):
        return pl.pallas_call(
            kernel,
            out_shape=jax.ShapeDtypeStruct((1, b_pad), jnp.float32),
            grid=grid,
            in_specs=[
                pl.BlockSpec((2, tb), lambda i: (0, i)),    # x tile (pipelined)
                const((16, 2)), const((16, 1)),             # w1, b1
                const((16, 16)), const((16, 1)),            # w2, b2
                const((16, 1)), const((1, 16)),             # w3, w3^T
                const((1, 1)),                              # b3
            ],
            out_specs=pl.BlockSpec((1, tb), lambda i: (0, i)),
            compiler_params=pltpu.CompilerParams(
                dimension_semantics=("parallel",),          # megacore on v7x
                vmem_limit_bytes=32 * 1024 * 1024,          # big tiles on v5e
            ),
        )(x_t, w1, b1, w2, b2, w3, w3t, b3)

    if _MXU_SMALL_DOTS_OK is None:
        try:
            out_t = jax.block_until_ready(run(_KERNEL_MXU))
            _MXU_SMALL_DOTS_OK = True
        except Exception:
            # Tiny-K / tiny-N MXU dots failed to lower on this generation; use
            # the previously-validated VPU formulation for layers 1 and 3.
            _MXU_SMALL_DOTS_OK = False
            out_t = run(_KERNEL_VPU)
    else:
        out_t = run(_KERNEL_MXU if _MXU_SMALL_DOTS_OK else _KERNEL_VPU)

    # NOTE: this slice/reshape is one extra HBM pass; return out_t[:, :B]
    # directly if the consumer accepts the [1, B] lane-major layout.
    return out_t[0, :B].reshape(B, 1)


def init_params(key):
    """Deterministic init matching PyTorch nn.Linear shapes (stored [in, out])."""
    ks = jax.random.split(key, 6)

    def uniform(k, shape, fan_in):
        bound = 1.0 / jnp.sqrt(fan_in)
        return jax.random.uniform(k, shape, jnp.float32, -bound, bound)

    return {
        "w1": uniform(ks[0], (2, 16), 2.0),
        "b1": uniform(ks[1], (1, 16), 2.0),
        "w2": uniform(ks[2], (16, 16), 16.0),
        "b2": uniform(ks[3], (1, 16), 16.0),
        "w3": uniform(ks[4], (16, 1), 16.0),
        "b3": uniform(ks[5], (1, 1), 16.0),
    }


def reference_forward(x, p):
    h1 = jnp.maximum(x @ p["w1"] + p["b1"], 0.0)
    h2 = jnp.maximum(h1 @ p["w2"] + p["b2"], 0.0)
    return jax.nn.sigmoid(h2 @ p["w3"] + p["b3"])


if __name__ == "__main__":
    key = jax.random.PRNGKey(0)
    k_x, k_p = jax.random.split(key)
    params = init_params(k_p)

    # Small batch (single padded grid step).
    x_small = jax.random.normal(k_x, (8, 2), jnp.float32)
    out_small = jax.block_until_ready(frontline_nn(x_small, params))
    ref_small = reference_forward(x_small, params)
    assert out_small.shape == (8, 1), out_small.shape
    assert jnp.allclose(out_small, ref_small, atol=1e-5, rtol=1e-5)

    # Ragged batch exercising multiple grid steps + tail padding.
    x_big = jax.random.normal(k_x, (300, 2), jnp.float32)
    out_big = jax.block_until_ready(frontline_nn(x_big, params))
    ref_big = reference_forward(x_big, params)
    assert out_big.shape == (300, 1), out_big.shape
    assert jnp.allclose(out_big, ref_big, atol=1e-5, rtol=1e-5)

    print("KERNEL_OK")
</pallas_src>

<mosaic_0001>
module attributes {stable_mosaic.version = 11 : i64} {
  func.func @kernel(%arg0: i32, %arg1: memref<2x128xf32, #tpu.memory_space<vmem>>, %arg2: memref<16x2xf32, #tpu.memory_space<vmem>>, %arg3: memref<16x1xf32, #tpu.memory_space<vmem>>, %arg4: memref<16x16xf32, #tpu.memory_space<vmem>>, %arg5: memref<16x1xf32, #tpu.memory_space<vmem>>, %arg6: memref<16x1xf32, #tpu.memory_space<vmem>>, %arg7: memref<1x16xf32, #tpu.memory_space<vmem>>, %arg8: memref<1x1xf32, #tpu.memory_space<vmem>>, %arg9: memref<1x128xf32, #tpu.memory_space<vmem>>) attributes {dimension_semantics = [#tpu.dimension_semantics<parallel>], iteration_bounds = array<i64: 1>, scalar_prefetch = 0 : i64, scratch_operands = 0 : i64, tpu.core_type = #tpu.core_type<tc>, window_params = [{transform_indices = @transform_0, window_bounds = array<i64: 2, 128>}, {pipeline_mode = #tpu.pipeline_mode<synchronous>, transform_indices = @transform_1, window_bounds = array<i64: 16, 2>}, {pipeline_mode = #tpu.pipeline_mode<synchronous>, transform_indices = @transform_2, window_bounds = array<i64: 16, 1>}, {pipeline_mode = #tpu.pipeline_mode<synchronous>, transform_indices = @transform_3, window_bounds = array<i64: 16, 16>}, {pipeline_mode = #tpu.pipeline_mode<synchronous>, transform_indices = @transform_4, window_bounds = array<i64: 16, 1>}, {pipeline_mode = #tpu.pipeline_mode<synchronous>, transform_indices = @transform_5, window_bounds = array<i64: 16, 1>}, {pipeline_mode = #tpu.pipeline_mode<synchronous>, transform_indices = @transform_6, window_bounds = array<i64: 1, 16>}, {pipeline_mode = #tpu.pipeline_mode<synchronous>, transform_indices = @transform_7, window_bounds = array<i64: 1, 1>}, {transform_indices = @transform_8, window_bounds = array<i64: 1, 128>}]} {
    %c0 = arith.constant 0 : index
    %c0_0 = arith.constant 0 : index
    %0 = vector.load %arg1[%c0, %c0_0] : memref<2x128xf32, #tpu.memory_space<vmem>>, vector<2x128xf32>
    %c0_1 = arith.constant 0 : index
    %c0_2 = arith.constant 0 : index
    %1 = vector.load %arg2[%c0_1, %c0_2] : memref<16x2xf32, #tpu.memory_space<vmem>>, vector<16x2xf32>
    %cst = arith.constant dense<0.000000e+00> : vector<16x128xf32>
    %2 = tpu.matmul %1, %0, %cst {dimension_numbers = #tpu.dot_dimension_numbers<[1], [0], [0], [1], [0, 0, 1, 1], [], []>} : vector<16x2xf32>, vector<2x128xf32>, vector<16x128xf32> -> vector<16x128xf32>
    %c0_3 = arith.constant 0 : index
    %c0_4 = arith.constant 0 : index
    %3 = vector.load %arg3[%c0_3, %c0_4] : memref<16x1xf32, #tpu.memory_space<vmem>>, vector<16x1xf32>
    %4 = vector.broadcast %3 : vector<16x1xf32> to vector<16x128xf32>
    %5 = arith.addf %2, %4 : vector<16x128xf32>
    %cst_5 = arith.constant 0.000000e+00 : f32
    %6 = vector.broadcast %cst_5 : f32 to vector<16x128xf32>
    %7 = arith.maximumf %5, %6 : vector<16x128xf32>
    %c0_6 = arith.constant 0 : index
    %c0_7 = arith.constant 0 : index
    %8 = vector.load %arg4[%c0_6, %c0_7] : memref<16x16xf32, #tpu.memory_space<vmem>>, vector<16x16xf32>
    %cst_8 = arith.constant dense<0.000000e+00> : vector<16x128xf32>
    %9 = tpu.matmul %8, %7, %cst_8 {dimension_numbers = #tpu.dot_dimension_numbers<[1], [0], [0], [1], [0, 0, 1, 1], [], []>} : vector<16x16xf32>, vector<16x128xf32>, vector<16x128xf32> -> vector<16x128xf32>
    %c0_9 = arith.constant 0 : index
    %c0_10 = arith.constant 0 : index
    %10 = vector.load %arg5[%c0_9, %c0_10] : memref<16x1xf32, #tpu.memory_space<vmem>>, vector<16x1xf32>
    %11 = vector.broadcast %10 : vector<16x1xf32> to vector<16x128xf32>
    %12 = arith.addf %9, %11 : vector<16x128xf32>
    %cst_11 = arith.constant 0.000000e+00 : f32
    %13 = vector.broadcast %cst_11 : f32 to vector<16x128xf32>
    %14 = arith.maximumf %12, %13 : vector<16x128xf32>
    %c0_12 = arith.constant 0 : index
    %c0_13 = arith.constant 0 : index
    %15 = vector.load %arg7[%c0_12, %c0_13] : memref<1x16xf32, #tpu.memory_space<vmem>>, vector<1x16xf32>
    %cst_14 = arith.constant dense<0.000000e+00> : vector<1x128xf32>
    %16 = tpu.matmul %15, %14, %cst_14 {dimension_numbers = #tpu.dot_dimension_numbers<[1], [0], [0], [1], [0, 0, 1, 1], [], []>} : vector<1x16xf32>, vector<16x128xf32>, vector<1x128xf32> -> vector<1x128xf32>
    %c0_15 = arith.constant 0 : index
    %c0_16 = arith.constant 0 : index
    %17 = vector.load %arg8[%c0_15, %c0_16] : memref<1x1xf32, #tpu.memory_space<vmem>>, vector<1x1xf32>
    %18 = vector.broadcast %17 : vector<1x1xf32> to vector<1x128xf32>
    %19 = arith.addf %16, %18 : vector<1x128xf32>
    %cst_17 = arith.constant 0.000000e+00 : f32
    %20 = vector.broadcast %cst_17 : f32 to vector<1x128xf32>
    %21 = arith.subf %20, %19 : vector<1x128xf32>
    %22 = math.exp %21 : vector<1x128xf32>
    %cst_18 = arith.constant 1.000000e+00 : f32
    %23 = vector.broadcast %cst_18 : f32 to vector<1x128xf32>
    %24 = arith.addf %23, %22 : vector<1x128xf32>
    %25 = tpu.reciprocal %24 : vector<1x128xf32> -> vector<1x128xf32>
    %c0_19 = arith.constant 0 : index
    %c0_20 = arith.constant 0 : index
    %26 = vector.load %arg9[%c0_19, %c0_20] : memref<1x128xf32, #tpu.memory_space<vmem>>, vector<1x128xf32>
    tpu.vector_store %arg9[%c0_19, %c0_20], %25 {strides = array<i32>} : memref<1x128xf32, #tpu.memory_space<vmem>>, vector<1x128xf32>,
    return
  }
  func.func @transform_0(%arg0: i32) -> (i32, i32) {
    %c0_i32 = arith.constant 0 : i32
    %c0_i32_0 = arith.constant 0 : i32
    return %c0_i32, %arg0 : i32, i32
  }
  func.func @transform_1(%arg0: i32) -> (i32, i32) {
    %c0_i32 = arith.constant 0 : i32
    %c0_i32_0 = arith.constant 0 : i32
    %c0_i32_1 = arith.constant 0 : i32
    return %c0_i32, %c0_i32_0 : i32, i32
  }
  func.func @transform_2(%arg0: i32) -> (i32, i32) {
    %c0_i32 = arith.constant 0 : i32
    %c0_i32_0 = arith.constant 0 : i32
    %c0_i32_1 = arith.constant 0 : i32
    return %c0_i32, %c0_i32_0 : i32, i32
  }
  func.func @transform_3(%arg0: i32) -> (i32, i32) {
    %c0_i32 = arith.constant 0 : i32
    %c0_i32_0 = arith.constant 0 : i32
    %c0_i32_1 = arith.constant 0 : i32
    return %c0_i32, %c0_i32_0 : i32, i32
  }
  func.func @transform_4(%arg0: i32) -> (i32, i32) {
    %c0_i32 = arith.constant 0 : i32
    %c0_i32_0 = arith.constant 0 : i32
    %c0_i32_1 = arith.constant 0 : i32
    return %c0_i32, %c0_i32_0 : i32, i32
  }
  func.func @transform_5(%arg0: i32) -> (i32, i32) {
    %c0_i32 = arith.constant 0 : i32
    %c0_i32_0 = arith.constant 0 : i32
    %c0_i32_1 = arith.constant 0 : i32
    return %c0_i32, %c0_i32_0 : i32, i32
  }
  func.func @transform_6(%arg0: i32) -> (i32, i32) {
    %c0_i32 = arith.constant 0 : i32
    %c0_i32_0 = arith.constant 0 : i32
    %c0_i32_1 = arith.constant 0 : i32
    return %c0_i32, %c0_i32_0 : i32, i32
  }
  func.func @transform_7(%arg0: i32) -> (i32, i32) {
    %c0_i32 = arith.constant 0 : i32
    %c0_i32_0 = arith.constant 0 : i32
    %c0_i32_1 = arith.constant 0 : i32
    return %c0_i32, %c0_i32_0 : i32, i32
  }
  func.func @transform_8(%arg0: i32) -> (i32, i32) {
    %c0_i32 = arith.constant 0 : i32
    %c0_i32_0 = arith.constant 0 : i32
    return %c0_i32, %arg0 : i32, i32
  }
}

module attributes {stable_mosaic.version = 11 : i64} {
  func.func @kernel(%arg0: i32, %arg1: memref<2x128xf32, #tpu.memory_space<vmem>>, %arg2: memref<16x2xf32, #tpu.memory_space<vmem>>, %arg3: memref<16x1xf32, #tpu.memory_space<vmem>>, %arg4: memref<16x16xf32, #tpu.memory_space<vmem>>, %arg5: memref<16x1xf32, #tpu.memory_space<vmem>>, %arg6: memref<16x1xf32, #tpu.memory_space<vmem>>, %arg7: memref<1x16xf32, #tpu.memory_space<vmem>>, %arg8: memref<1x1xf32, #tpu.memory_space<vmem>>, %arg9: memref<1x128xf32, #tpu.memory_space<vmem>>) attributes {dimension_semantics = [#tpu.dimension_semantics<parallel>], iteration_bounds = array<i64: 1>, scalar_prefetch = 0 : i64, scratch_operands = 0 : i64, tpu.core_type = #tpu.core_type<tc>, window_params = [{transform_indices = @transform_0, window_bounds = array<i64: 2, 128>}, {pipeline_mode = #tpu.pipeline_mode<synchronous>, transform_indices = @transform_1, window_bounds = array<i64: 16, 2>}, {pipeline_mode = #tpu.pipeline_mode<synchronous>, transform_indices = @transform_2, window_bounds = array<i64: 16, 1>}, {pipeline_mode = #tpu.pipeline_mode<synchronous>, transform_indices = @transform_3, window_bounds = array<i64: 16, 16>}, {pipeline_mode = #tpu.pipeline_mode<synchronous>, transform_indices = @transform_4, window_bounds = array<i64: 16, 1>}, {pipeline_mode = #tpu.pipeline_mode<synchronous>, transform_indices = @transform_5, window_bounds = array<i64: 16, 1>}, {pipeline_mode = #tpu.pipeline_mode<synchronous>, transform_indices = @transform_6, window_bounds = array<i64: 1, 16>}, {pipeline_mode = #tpu.pipeline_mode<synchronous>, transform_indices = @transform_7, window_bounds = array<i64: 1, 1>}, {transform_indices = @transform_8, window_bounds = array<i64: 1, 128>}]} {
    %c0 = arith.constant 0 : index
    %c0_0 = arith.constant 0 : index
    %0 = vector.load %arg1[%c0, %c0_0] : memref<2x128xf32, #tpu.memory_space<vmem>>, vector<2x128xf32>
    %c0_1 = arith.constant 0 : index
    %c0_2 = arith.constant 0 : index
    %1 = vector.load %arg2[%c0_1, %c0_2] : memref<16x2xf32, #tpu.memory_space<vmem>>, vector<16x2xf32>
    %2 = vector.extract_strided_slice %1 {offsets = [0, 0], sizes = [16, 1], strides = [1, 1]} : vector<16x2xf32> to vector<16x1xf32>
    %3 = vector.extract_strided_slice %0 {offsets = [0, 0], sizes = [1, 128], strides = [1, 1]} : vector<2x128xf32> to vector<1x128xf32>
    %4 = vector.broadcast %2 : vector<16x1xf32> to vector<16x128xf32>
    %5 = vector.broadcast %3 : vector<1x128xf32> to vector<16x128xf32>
    %6 = arith.mulf %4, %5 : vector<16x128xf32>
    %7 = vector.extract_strided_slice %1 {offsets = [0, 1], sizes = [16, 1], strides = [1, 1]} : vector<16x2xf32> to vector<16x1xf32>
    %8 = vector.extract_strided_slice %0 {offsets = [1, 0], sizes = [1, 128], strides = [1, 1]} : vector<2x128xf32> to vector<1x128xf32>
    %9 = vector.broadcast %7 : vector<16x1xf32> to vector<16x128xf32>
    %10 = vector.broadcast %8 : vector<1x128xf32> to vector<16x128xf32>
    %11 = arith.mulf %9, %10 : vector<16x128xf32>
    %12 = arith.addf %6, %11 : vector<16x128xf32>
    %c0_3 = arith.constant 0 : index
    %c0_4 = arith.constant 0 : index
    %13 = vector.load %arg3[%c0_3, %c0_4] : memref<16x1xf32, #tpu.memory_space<vmem>>, vector<16x1xf32>
    %14 = vector.broadcast %13 : vector<16x1xf32> to vector<16x128xf32>
    %15 = arith.addf %12, %14 : vector<16x128xf32>
    %cst = arith.constant 0.000000e+00 : f32
    %16 = vector.broadcast %cst : f32 to vector<16x128xf32>
    %17 = arith.maximumf %15, %16 : vector<16x128xf32>
    %c0_5 = arith.constant 0 : index
    %c0_6 = arith.constant 0 : index
    %18 = vector.load %arg4[%c0_5, %c0_6] : memref<16x16xf32, #tpu.memory_space<vmem>>, vector<16x16xf32>
    %cst_7 = arith.constant dense<0.000000e+00> : vector<16x128xf32>
    %19 = tpu.matmul %18, %17, %cst_7 {dimension_numbers = #tpu.dot_dimension_numbers<[1], [0], [0], [1], [0, 0, 1, 1], [], []>} : vector<16x16xf32>, vector<16x128xf32>, vector<16x128xf32> -> vector<16x128xf32>
    %c0_8 = arith.constant 0 : index
    %c0_9 = arith.constant 0 : index
    %20 = vector.load %arg5[%c0_8, %c0_9] : memref<16x1xf32, #tpu.memory_space<vmem>>, vector<16x1xf32>
    %21 = vector.broadcast %20 : vector<16x1xf32> to vector<16x128xf32>
    %22 = arith.addf %19, %21 : vector<16x128xf32>
    %cst_10 = arith.constant 0.000000e+00 : f32
    %23 = vector.broadcast %cst_10 : f32 to vector<16x128xf32>
    %24 = arith.maximumf %22, %23 : vector<16x128xf32>
    %c0_11 = arith.constant 0 : index
    %c0_12 = arith.constant 0 : index
    %25 = vector.load %arg6[%c0_11, %c0_12] : memref<16x1xf32, #tpu.memory_space<vmem>>, vector<16x1xf32>
    %26 = vector.broadcast %25 : vector<16x1xf32> to vector<16x128xf32>
    %27 = arith.mulf %26, %24 : vector<16x128xf32>
    %cst_13 = arith.constant dense<0.000000e+00> : vector<128xf32>
    %28 = vector.multi_reduction <add>, %27, %cst_13 [0] : vector<16x128xf32> to vector<128xf32>
    %29 = vector.shape_cast %28 : vector<128xf32> to vector<1x128xf32>
    %c0_14 = arith.constant 0 : index
    %c0_15 = arith.constant 0 : index
    %30 = vector.load %arg8[%c0_14, %c0_15] : memref<1x1xf32, #tpu.memory_space<vmem>>, vector<1x1xf32>
    %31 = vector.broadcast %30 : vector<1x1xf32> to vector<1x128xf32>
    %32 = arith.addf %29, %31 : vector<1x128xf32>
    %cst_16 = arith.constant 0.000000e+00 : f32
    %33 = vector.broadcast %cst_16 : f32 to vector<1x128xf32>
    %34 = arith.subf %33, %32 : vector<1x128xf32>
    %35 = math.exp %34 : vector<1x128xf32>
    %cst_17 = arith.constant 1.000000e+00 : f32
    %36 = vector.broadcast %cst_17 : f32 to vector<1x128xf32>
    %37 = arith.addf %36, %35 : vector<1x128xf32>
    %38 = tpu.reciprocal %37 : vector<1x128xf32> -> vector<1x128xf32>
    %c0_18 = arith.constant 0 : index
    %c0_19 = arith.constant 0 : index
    %39 = vector.load %arg9[%c0_18, %c0_19] : memref<1x128xf32, #tpu.memory_space<vmem>>, vector<1x128xf32>
    tpu.vector_store %arg9[%c0_18, %c0_19], %38 {strides = array<i32>} : memref<1x128xf32, #tpu.memory_space<vmem>>, vector<1x128xf32>,
    return
  }
  func.func @transform_0(%arg0: i32) -> (i32, i32) {
    %c0_i32 = arith.constant 0 : i32
    %c0_i32_0 = arith.constant 0 : i32
    return %c0_i32, %arg0 : i32, i32
  }
  func.func @transform_1(%arg0: i32) -> (i32, i32) {
    %c0_i32 = arith.constant 0 : i32
    %c0_i32_0 = arith.constant 0 : i32
    %c0_i32_1 = arith.constant 0 : i32
    return %c0_i32, %c0_i32_0 : i32, i32
  }
  func.func @transform_2(%arg0: i32) -> (i32, i32) {
    %c0_i32 = arith.constant 0 : i32
    %c0_i32_0 = arith.constant 0 : i32
    %c0_i32_1 = arith.constant 0 : i32
    return %c0_i32, %c0_i32_0 : i32, i32
  }
  func.func @transform_3(%arg0: i32) -> (i32, i32) {
    %c0_i32 = arith.constant 0 : i32
    %c0_i32_0 = arith.constant 0 : i32
    %c0_i32_1 = arith.constant 0 : i32
    return %c0_i32, %c0_i32_0 : i32, i32
  }
  func.func @transform_4(%arg0: i32) -> (i32, i32) {
    %c0_i32 = arith.constant 0 : i32
    %c0_i32_0 = arith.constant 0 : i32
    %c0_i32_1 = arith.constant 0 : i32
    return %c0_i32, %c0_i32_0 : i32, i32
  }
  func.func @transform_5(%arg0: i32) -> (i32, i32) {
    %c0_i32 = arith.constant 0 : i32
    %c0_i32_0 = arith.constant 0 : i32
    %c0_i32_1 = arith.constant 0 : i32
    return %c0_i32, %c0_i32_0 : i32, i32
  }
  func.func @transform_6(%arg0: i32) -> (i32, i32) {
    %c0_i32 = arith.constant 0 : i32
    %c0_i32_0 = arith.constant 0 : i32
    %c0_i32_1 = arith.constant 0 : i32
    return %c0_i32, %c0_i32_0 : i32, i32
  }
  func.func @transform_7(%arg0: i32) -> (i32, i32) {
    %c0_i32 = arith.constant 0 : i32
    %c0_i32_0 = arith.constant 0 : i32
    %c0_i32_1 = arith.constant 0 : i32
    return %c0_i32, %c0_i32_0 : i32, i32
  }
  func.func @transform_8(%arg0: i32) -> (i32, i32) {
    %c0_i32 = arith.constant 0 : i32
    %c0_i32_0 = arith.constant 0 : i32
    return %c0_i32, %arg0 : i32, i32
  }
}

</mosaic_0001>

<llo_original>
// kernel: tpu_custom_call.1
$region0: #{tpu_custom_call.1}
  #allocation0 [shape = 'u32[]', space=smem, size = 0x4, offset = 0x4, fixed_abs, tag = 'smem constant byte address 0x4 - core index']
  #allocation1 [shape = 'u32[144,128]{1,0:T(1,128)}', space=vmem, size = 0x12000, scoped, tag = 'internal scratch']
  #allocation2 [shape = 'f32[1,1]{1,0:T(1,128)S(1)}', space=vmem, size = 0x200, scoped, tag = 'scoped memory for tpu_custom_call.1']
  %s0 = inlined_call_operand.vmem [shape: f32[2,128], index: 0, kind: input, shape index: {}]
  %s1 = inlined_call_operand.vmem [shape: f32[16,2], index: 1, kind: input, shape index: {}]
  %s2 = inlined_call_operand.vmem [shape: f32[16,1], index: 2, kind: input, shape index: {}]
  %s3 = inlined_call_operand.vmem [shape: f32[16,16], index: 3, kind: input, shape index: {}]
  %s4 = inlined_call_operand.vmem [shape: f32[16,1], index: 4, kind: input, shape index: {}]
  %s5 = inlined_call_operand.vmem [shape: f32[16,1], index: 5, kind: input, shape index: {}]
  %s6 = inlined_call_operand.vmem [shape: f32[1,16], index: 6, kind: input, shape index: {}]
  %s7 = inlined_call_operand.<no memory space> [shape: f32[1,1], index: 7, kind: input, shape index: {}]
  %s8 = inlined_call_operand.hbm [shape: f32[1,128], index: 8, kind: output, shape index: {}]
  %s9 = sld [smem:[#allocation0]]
  $region42: #{tpu_custom_call.1} parent=0
    _
  %s11 = ssub.s32 1, %s9
  %s12 = scalar_select 0, %s11, %s9
  %v13 = vstv %s7
  %14 = vst [vmem:[#allocation2] sm:$0x1] %v13
  $region1: #{tpu_custom_call.1} parent=0
    #allocation3 [shape = 'u8[512]{0}', space=vmem, size = 0x400, scoped, tag = 'output window, operand 0, single buffered']
    #allocation4 [shape = 's32[1]{0}', space=sflag, size = 0x4, scoped, tag = 'scoped memory for tpu_custom_call.1']
    %15 = vsyncpa [#allocation4], 0
    // Predicated region
    $region2: #{tpu_custom_call.1} parent=1 // pred_check
      _
    $region3: #{tpu_custom_call.1} parent=1 // pred_check_branch
      %17 = sbr.rel (0) target = $region5
    $region4: #{tpu_custom_call.1} parent=1 // pred_region
      _
    $region5: #{tpu_custom_call.1} parent=1 // pred_fallthru
      _
    // Predicated region
    $region6: #{tpu_custom_call.1} parent=1 // pred_check
      _
    $region7: #{tpu_custom_call.1} parent=1 // pred_check_branch
      %19 = sbr.rel (0) target = $region9
    $region8: #{tpu_custom_call.1} parent=1 // pred_region
      _
    $region9: #{tpu_custom_call.1} parent=1 // pred_fallthru
      _
    // Predicated region
    $region10: #{tpu_custom_call.1} parent=1 // pred_check
      _
    $region11: #{tpu_custom_call.1} parent=1 // pred_check_branch
      %21 = sbr.rel (0) target = $region13
    $region12: #{tpu_custom_call.1} parent=1 // pred_region
      _
    $region13: #{tpu_custom_call.1} parent=1 // pred_fallthru
      _
    // Predicated region
    $region14: #{tpu_custom_call.1} parent=1 // pred_check
      _
    $region15: #{tpu_custom_call.1} parent=1 // pred_check_branch
      %23 = sbr.rel (0) target = $region17
    $region16: #{tpu_custom_call.1} parent=1 // pred_region
      _
    $region17: #{tpu_custom_call.1} parent=1 // pred_fallthru
      _
    // Predicated region
    $region18: #{tpu_custom_call.1} parent=1 // pred_check
      _
    $region19: #{tpu_custom_call.1} parent=1 // pred_check_branch
      %25 = sbr.rel (0) target = $region21
    $region20: #{tpu_custom_call.1} parent=1 // pred_region
      _
    $region21: #{tpu_custom_call.1} parent=1 // pred_fallthru
      _
    // Predicated region
    $region22: #{tpu_custom_call.1} parent=1 // pred_check
      _
    $region23: #{tpu_custom_call.1} parent=1 // pred_check_branch
      %27 = sbr.rel (0) target = $region25
    $region24: #{tpu_custom_call.1} parent=1 // pred_region
      _
    $region25: #{tpu_custom_call.1} parent=1 // pred_fallthru
      _
    // Predicated region
    $region26: #{tpu_custom_call.1} parent=1 // pred_check
      _
    $region27: #{tpu_custom_call.1} parent=1 // pred_check_branch
      %29 = sbr.rel (0) target = $region29
    $region28: #{tpu_custom_call.1} parent=1 // pred_region
      _
    $region29: #{tpu_custom_call.1} parent=1 // pred_fallthru
      _
    // Predicated region
    $region30: #{tpu_custom_call.1} parent=1 // pred_check
      _
    $region31: #{tpu_custom_call.1} parent=1 // pred_check_branch
      %31 = sbr.rel (0) target = $region33
    $region32: #{tpu_custom_call.1} parent=1 // pred_region
      _
    $region33: #{tpu_custom_call.1} parent=1 // pred_fallthru
      _
    %v32 = vld [vmem:[%s0] sm:$0x3]
    %v33 = vld [vmem:[%s1] sm:$0xff]
    %v34 = vld [vmem:[%s1 + $0x8] sm:$0xff]
    %v35 = vld [vmem:[%s2] sm:$0xff]
    %v36 = vld [vmem:[%s2 + $0x8] sm:$0xff]
    %38 = vset.pattern.permute.xlu0 0
    %39 = vperm.xlu0 %38, %v35
    %v40 = vpop.permute.xlu0 %39
    %43 = vset.pattern.permute.xlu0 0
    %44 = vperm.xlu0 %43, %v36
    %v45 = vpop.permute.xlu0 %44
    %vm47 = vcmask 15360
    %v49 = vsel %vm47, %v33, 0
    %v52 = vsel %vm47, %v34, 0
    %vm54 = vcmask 1041408
    %v56 = vsel %vm54, %v32, 0
    %58 = vmatprep.subr.mxu0 0.0
    %59 = vmatpush1.msra.mxu0 0.0
    %60 = vmatprep.subr.mxu0 0.0
    %61 = vmatpush1.msra.mxu0 0.0
    %62 = vmatprep.subr.mxu0 0.0
    %63 = vmatpush1.msra.mxu0 0.0
    %64 = vmatprep.subr.mxu0 0.0
    %65 = vmatpush1.msra.mxu0 0.0
    %66 = vmatprep.subr.mxu0 0.0
    %67 = vmatpush1.msra.mxu0 0.0
    %68 = vmatprep.subr.mxu0 0.0
    %69 = vmatpush1.msra.mxu0 0.0
    %70 = vmatprep.subr.mxu0 0.0
    %71 = vmatpush1.msra.mxu0 0.0
    %72 = vmatprep.subr.mxu0 0.0
    %73 = vmatpush1.msra.mxu0 0.0
    %74 = vmatprep.subr.mxu0 0.0
    %75 = vmatpush1.msra.mxu0 0.0
    %76 = vmatprep.subr.mxu0 0.0
    %77 = vmatpush1.msra.mxu0 0.0
    %78 = vmatprep.subr.mxu0 0.0
    %79 = vmatpush1.msra.mxu0 0.0
    %80 = vmatprep.subr.mxu0 0.0
    %81 = vmatpush1.msra.mxu0 0.0
    %82 = vmatprep.subr.mxu0 0.0
    %83 = vmatpush1.msra.mxu0 0.0
    %84 = vmatprep.subr.mxu0 0.0
    %85 = vmatpush1.msra.mxu0 0.0
    %86 = vmatprep.subr.mxu0 0.0
    %87 = vmatpush1.msra.mxu0 0.0
    %88 = vmatprep.subr.mxu0 0.0
    %89 = vmatpush1.msra.mxu0 %v56
    %90 = vmatprep.subr.mxu0 0.0
    %91 = vmatpush2.msra.mxu0 0.0
    %92 = vmatprep.subr.mxu0 0.0
    %93 = vmatpush2.msra.mxu0 0.0
    %94 = vmatprep.subr.mxu0 0.0
    %95 = vmatpush2.msra.mxu0 0.0
    %96 = vmatprep.subr.mxu0 0.0
    %97 = vmatpush2.msra.mxu0 0.0
    %98 = vmatprep.subr.mxu0 0.0
    %99 = vmatpush2.msra.mxu0 0.0
    %100 = vmatprep.subr.mxu0 0.0
    %101 = vmatpush2.msra.mxu0 0.0
    %102 = vmatprep.subr.mxu0 0.0
    %103 = vmatpush2.msra.mxu0 0.0
    %104 = vmatprep.subr.mxu0 0.0
    %105 = vmatpush2.msra.mxu0 0.0
    %106 = vmatprep.subr.mxu0 0.0
    %107 = vmatpush2.msra.mxu0 0.0
    %108 = vmatprep.subr.mxu0 0.0
    %109 = vmatpush2.msra.mxu0 0.0
    %110 = vmatprep.subr.mxu0 0.0
    %111 = vmatpush2.msra.mxu0 0.0
    %112 = vmatprep.subr.mxu0 0.0
    %113 = vmatpush2.msra.mxu0 0.0
    %114 = vmatprep.subr.mxu0 0.0
    %115 = vmatpush2.msra.mxu0 0.0
    %116 = vmatprep.subr.mxu0 0.0
    %117 = vmatpush2.msra.mxu0 0.0
    %118 = vmatprep.subr.mxu0 0.0
    %119 = vmatpush2.msra.mxu0 0.0
    %120 = vmatprep.subr.mxu0 0.0
    %121 = vmatpush2.msra.mxu0 0.0
    %122 = vmatprep.mubr.f32.mxu0 0.0
    %123 = vmatmul.mubr.f32.gmra.mxu0 %v49
    %v124 = vpop.f32.mrf.mxu0
    %v125 = vadd.f32 %v40, %v124
    %v126 = vpop.f32.mrf.mxu0
    %127 = vmatprep.mubr.f32.mxu0 0.0
    %128 = vmatmul.mubr.f32.gmra.mxu0 %v52
    %v129 = vpop.f32.mrf.mxu0
    %v130 = vadd.f32 %v45, %v129
    %v131 = vpop.f32.mrf.mxu0
    %132 = vdwg.mxu0
    %v133 = vmax.f32 %v125, 0.0
    %v134 = vmax.f32 %v130, 0.0
    %v135 = vld [vmem:[%s3] sm:$0xff]
    %v136 = vld [vmem:[%s3 + $0x8] sm:$0xff]
    %v137 = vld [vmem:[%s4] sm:$0xff]
    %v138 = vld [vmem:[%s4 + $0x8] sm:$0xff]
    %140 = vset.pattern.permute.xlu0 0
    %141 = vperm.xlu0 %140, %v137
    %v142 = vpop.permute.xlu0 %141
    %145 = vset.pattern.permute.xlu0 0
    %146 = vperm.xlu0 %145, %v138
    %v147 = vpop.permute.xlu0 %146
    %vm149 = vcmask 130048
    %v151 = vsel %vm149, %v135, 0
    %v154 = vsel %vm149, %v136, 0
    %156 = vmatprep.subr.mxu0 0.0
    %157 = vmatpush1.msra.mxu0 0.0
    %158 = vmatprep.subr.mxu0 0.0
    %159 = vmatpush1.msra.mxu0 0.0
    %160 = vmatprep.subr.mxu0 0.0
    %161 = vmatpush1.msra.mxu0 0.0
    %162 = vmatprep.subr.mxu0 0.0
    %163 = vmatpush1.msra.mxu0 0.0
    %164 = vmatprep.subr.mxu0 0.0
    %165 = vmatpush1.msra.mxu0 0.0
    %166 = vmatprep.subr.mxu0 0.0
    %167 = vmatpush1.msra.mxu0 0.0
    %168 = vmatprep.subr.mxu0 0.0
    %169 = vmatpush1.msra.mxu0 0.0
    %170 = vmatprep.subr.mxu0 0.0
    %171 = vmatpush1.msra.mxu0 0.0
    %172 = vmatprep.subr.mxu0 0.0
    %173 = vmatpush1.msra.mxu0 0.0
    %174 = vmatprep.subr.mxu0 0.0
    %175 = vmatpush1.msra.mxu0 0.0
    %176 = vmatprep.subr.mxu0 0.0
    %177 = vmatpush1.msra.mxu0 0.0
    %178 = vmatprep.subr.mxu0 0.0
    %179 = vmatpush1.msra.mxu0 0.0
    %180 = vmatprep.subr.mxu0 0.0
    %181 = vmatpush1.msra.mxu0 0.0
    %182 = vmatprep.subr.mxu0 0.0
    %183 = vmatpush1.msra.mxu0 0.0
    %184 = vmatprep.subr.mxu0 0.0
    %185 = vmatpush1.msra.mxu0 %v134
    %186 = vmatprep.subr.mxu0 0.0
    %187 = vmatpush1.msra.mxu0 %v133
    %188 = vmatprep.subr.mxu0 0.0
    %189 = vmatpush2.msra.mxu0 0.0
    %190 = vmatprep.subr.mxu0 0.0
    %191 = vmatpush2.msra.mxu0 0.0
    %192 = vmatprep.subr.mxu0 0.0
    %193 = vmatpush2.msra.mxu0 0.0
    %194 = vmatprep.subr.mxu0 0.0
    %195 = vmatpush2.msra.mxu0 0.0
    %196 = vmatprep.subr.mxu0 0.0
    %197 = vmatpush2.msra.mxu0 0.0
    %198 = vmatprep.subr.mxu0 0.0
    %199 = vmatpush2.msra.mxu0 0.0
    %200 = vmatprep.subr.mxu0 0.0
    %201 = vmatpush2.msra.mxu0 0.0
    %202 = vmatprep.subr.mxu0 0.0
    %203 = vmatpush2.msra.mxu0 0.0
    %204 = vmatprep.subr.mxu0 0.0
    %205 = vmatpush2.msra.mxu0 0.0
    %206 = vmatprep.subr.mxu0 0.0
    %207 = vmatpush2.msra.mxu0 0.0
    %208 = vmatprep.subr.mxu0 0.0
    %209 = vmatpush2.msra.mxu0 0.0
    %210 = vmatprep.subr.mxu0 0.0
    %211 = vmatpush2.msra.mxu0 0.0
    %212 = vmatprep.subr.mxu0 0.0
    %213 = vmatpush2.msra.mxu0 0.0
    %214 = vmatprep.subr.mxu0 0.0
    %215 = vmatpush2.msra.mxu0 0.0
    %216 = vmatprep.subr.mxu0 0.0
    %217 = vmatpush2.msra.mxu0 0.0
    %218 = vmatprep.subr.mxu0 0.0
    %219 = vmatpush2.msra.mxu0 0.0
    %220 = vmatprep.mubr.f32.mxu0 0.0
    %221 = vmatmul.mubr.f32.gmra.mxu0 %v151
    %v222 = vpop.f32.mrf.mxu0
    %v223 = vadd.f32 %v142, %v222
    %v224 = vpop.f32.mrf.mxu0
    %225 = vmatprep.mubr.f32.mxu0 0.0
    %226 = vmatmul.mubr.f32.gmra.mxu0 %v154
    %v227 = vpop.f32.mrf.mxu0
    %v228 = vadd.f32 %v147, %v227
    %v229 = vpop.f32.mrf.mxu0
    %230 = vdwg.mxu0
    %v231 = vmax.f32 %v223, 0.0
    %v232 = vmax.f32 %v228, 0.0
    %v233 = vld [vmem:[%s6] sm:$0x1]
    %v234 = vld [vmem:[#allocation2] sm:$0x1]
    %236 = vset.pattern.permute.xlu0 0
    %237 = vperm.xlu0 %236, %v234
    %v238 = vpop.permute.xlu0 %237
    %v240 = vlaneseq
    %v241 = vshrl.u32 %v240, 7
    %v242 = vsub.s32 0, %v241
    %v243 = vrot.slane %v238, %v242
    %v245 = vsel %vm149, %v233, 0
    %247 = vmatprep.subr.mxu0 0.0
    %248 = vmatpush1.msra.mxu0 0.0
    %249 = vmatprep.subr.mxu0 0.0
    %250 = vmatpush1.msra.mxu0 0.0
    %251 = vmatprep.subr.mxu0 0.0
    %252 = vmatpush1.msra.mxu0 0.0
    %253 = vmatprep.subr.mxu0 0.0
    %254 = vmatpush1.msra.mxu0 0.0
    %255 = vmatprep.subr.mxu0 0.0
    %256 = vmatpush1.msra.mxu0 0.0
    %257 = vmatprep.subr.mxu0 0.0
    %258 = vmatpush1.msra.mxu0 0.0
    %259 = vmatprep.subr.mxu0 0.0
    %260 = vmatpush1.msra.mxu0 0.0
    %261 = vmatprep.subr.mxu0 0.0
    %262 = vmatpush1.msra.mxu0 0.0
    %263 = vmatprep.subr.mxu0 0.0
    %264 = vmatpush1.msra.mxu0 0.0
    %265 = vmatprep.subr.mxu0 0.0
    %266 = vmatpush1.msra.mxu0 0.0
    %267 = vmatprep.subr.mxu0 0.0
    %268 = vmatpush1.msra.mxu0 0.0
    %269 = vmatprep.subr.mxu0 0.0
    %270 = vmatpush1.msra.mxu0 0.0
    %271 = vmatprep.subr.mxu0 0.0
    %272 = vmatpush1.msra.mxu0 0.0
    %273 = vmatprep.subr.mxu0 0.0
    %274 = vmatpush1.msra.mxu0 0.0
    %275 = vmatprep.subr.mxu0 0.0
    %276 = vmatpush1.msra.mxu0 %v232
    %277 = vmatprep.subr.mxu0 0.0
    %278 = vmatpush1.msra.mxu0 %v231
    %279 = vmatprep.subr.mxu0 0.0
    %280 = vmatpush2.msra.mxu0 0.0
    %281 = vmatprep.subr.mxu0 0.0
    %282 = vmatpush2.msra.mxu0 0.0
    %283 = vmatprep.subr.mxu0 0.0
    %284 = vmatpush2.msra.mxu0 0.0
    %285 = vmatprep.subr.mxu0 0.0
    %286 = vmatpush2.msra.mxu0 0.0
    %287 = vmatprep.subr.mxu0 0.0
    %288 = vmatpush2.msra.mxu0 0.0
    %289 = vmatprep.subr.mxu0 0.0
    %290 = vmatpush2.msra.mxu0 0.0
    %291 = vmatprep.subr.mxu0 0.0
    %292 = vmatpush2.msra.mxu0 0.0
    %293 = vmatprep.subr.mxu0 0.0
    %294 = vmatpush2.msra.mxu0 0.0
    %295 = vmatprep.subr.mxu0 0.0
    %296 = vmatpush2.msra.mxu0 0.0
    %297 = vmatprep.subr.mxu0 0.0
    %298 = vmatpush2.msra.mxu0 0.0
    %299 = vmatprep.subr.mxu0 0.0
    %300 = vmatpush2.msra.mxu0 0.0
    %301 = vmatprep.subr.mxu0 0.0
    %302 = vmatpush2.msra.mxu0 0.0
    %303 = vmatprep.subr.mxu0 0.0
    %304 = vmatpush2.msra.mxu0 0.0
    %305 = vmatprep.subr.mxu0 0.0
    %306 = vmatpush2.msra.mxu0 0.0
    %307 = vmatprep.subr.mxu0 0.0
    %308 = vmatpush2.msra.mxu0 0.0
    %309 = vmatprep.subr.mxu0 0.0
    %310 = vmatpush2.msra.mxu0 0.0
    %311 = vmatprep.mubr.f32.mxu0 0.0
    %312 = vmatmul.mubr.f32.gmra.mxu0 %v245
    %v313 = vpop.f32.mrf.mxu0
    %v314 = vadd.f32 %v243, %v313
    %v315 = vpop.f32.mrf.mxu0
    %316 = vdwg.mxu0
    %v317 = vsub.f32 0.0, %v314
    %v318 = vmul.f32 %v317, 1.442695
    %v319 = vpow.pop %v318
    %v320 = vadd.f32 %v319, 1.0
    %v321 = vrcp.pop %v320
    %322 = vst [vmem:[#allocation3] sm:$0x1] %v321
    // Predicated region
    $region34: #{tpu_custom_call.1} parent=1 // pred_check
      _
    $region35: #{tpu_custom_call.1} parent=1 // pred_check_branch
      %324 = sbr.rel (0) target = $region37
    $region36: #{tpu_custom_call.1} parent=1 // pred_region
      %s326 = ssub.s32 16, 16
      %327 = vsyncadd [#allocation4], %s326
      %s329 = sshll.u32 [#allocation3], 4
      %s330 = int_to_ptr.vmem [resolvable:$true] %s329
      %332 = dma.vmem_to_hbm [thread:$0]  %s330, 16, %s8, [#allocation4]
    $region37: #{tpu_custom_call.1} parent=1 // pred_fallthru
      _
    // Predicated region
    $region38: #{tpu_custom_call.1} parent=1 // pred_check
      _
    $region39: #{tpu_custom_call.1} parent=1 // pred_check_branch
      %334 = sbr.rel (0) target = $region41
    $region40: #{tpu_custom_call.1} parent=1 // pred_region
      %335 = dma.done [#allocation4], 16
    $region41: #{tpu_custom_call.1} parent=1 // pred_fallthru
      _
    %336 = vsyncpa [#allocation4], 1

// kernel: tpu_custom_call.1
$region0: #{tpu_custom_call.1}
  #allocation0 [shape = 'u32[]', space=smem, size = 0x4, offset = 0x4, fixed_abs, tag = 'smem constant byte address 0x4 - core index']
  #allocation1 [shape = 'u32[144,128]{1,0:T(1,128)}', space=vmem, size = 0x12000, scoped, tag = 'internal scratch']
  #allocation2 [shape = 'f32[1,1]{1,0:T(1,128)S(1)}', space=vmem, size = 0x200, scoped, tag = 'scoped memory for tpu_custom_call.1']
  %s0 = inlined_call_operand.vmem [shape: f32[2,128], index: 0, kind: input, shape index: {}]
  %s1 = inlined_call_operand.vmem [shape: f32[16,2], index: 1, kind: input, shape index: {}]
  %s2 = inlined_call_operand.vmem [shape: f32[16,1], index: 2, kind: input, shape index: {}]
  %s3 = inlined_call_operand.vmem [shape: f32[16,16], index: 3, kind: input, shape index: {}]
  %s4 = inlined_call_operand.vmem [shape: f32[16,1], index: 4, kind: input, shape index: {}]
  %s5 = inlined_call_operand.vmem [shape: f32[16,1], index: 5, kind: input, shape index: {}]
  %s6 = inlined_call_operand.vmem [shape: f32[1,16], index: 6, kind: input, shape index: {}]
  %s7 = inlined_call_operand.<no memory space> [shape: f32[1,1], index: 7, kind: input, shape index: {}]
  %s8 = inlined_call_operand.hbm [shape: f32[1,128], index: 8, kind: output, shape index: {}]
  %s9 = sld [smem:[#allocation0]]
  $region42: #{tpu_custom_call.1} parent=0
    _
  %s11 = ssub.s32 1, %s9
  %s12 = scalar_select 0, %s11, %s9
  %v13 = vstv %s7
  %14 = vst [vmem:[#allocation2] sm:$0x1] %v13
  $region1: #{tpu_custom_call.1} parent=0
    #allocation3 [shape = 'u8[512]{0}', space=vmem, size = 0x400, scoped, tag = 'output window, operand 0, single buffered']
    #allocation4 [shape = 's32[1]{0}', space=sflag, size = 0x4, scoped, tag = 'scoped memory for tpu_custom_call.1']
    %15 = vsyncpa [#allocation4], 0
    // Predicated region
    $region2: #{tpu_custom_call.1} parent=1 // pred_check
      _
    $region3: #{tpu_custom_call.1} parent=1 // pred_check_branch
      %17 = sbr.rel (0) target = $region5
    $region4: #{tpu_custom_call.1} parent=1 // pred_region
      _
    $region5: #{tpu_custom_call.1} parent=1 // pred_fallthru
      _
    // Predicated region
    $region6: #{tpu_custom_call.1} parent=1 // pred_check
      _
    $region7: #{tpu_custom_call.1} parent=1 // pred_check_branch
      %19 = sbr.rel (0) target = $region9
    $region8: #{tpu_custom_call.1} parent=1 // pred_region
      _
    $region9: #{tpu_custom_call.1} parent=1 // pred_fallthru
      _
    // Predicated region
    $region10: #{tpu_custom_call.1} parent=1 // pred_check
      _
    $region11: #{tpu_custom_call.1} parent=1 // pred_check_branch
      %21 = sbr.rel (0) target = $region13
    $region12: #{tpu_custom_call.1} parent=1 // pred_region
      _
    $region13: #{tpu_custom_call.1} parent=1 // pred_fallthru
      _
    // Predicated region
    $region14: #{tpu_custom_call.1} parent=1 // pred_check
      _
    $region15: #{tpu_custom_call.1} parent=1 // pred_check_branch
      %23 = sbr.rel (0) target = $region17
    $region16: #{tpu_custom_call.1} parent=1 // pred_region
      _
    $region17: #{tpu_custom_call.1} parent=1 // pred_fallthru
      _
    // Predicated region
    $region18: #{tpu_custom_call.1} parent=1 // pred_check
      _
    $region19: #{tpu_custom_call.1} parent=1 // pred_check_branch
      %25 = sbr.rel (0) target = $region21
    $region20: #{tpu_custom_call.1} parent=1 // pred_region
      _
    $region21: #{tpu_custom_call.1} parent=1 // pred_fallthru
      _
    // Predicated region
    $region22: #{tpu_custom_call.1} parent=1 // pred_check
      _
    $region23: #{tpu_custom_call.1} parent=1 // pred_check_branch
      %27 = sbr.rel (0) target = $region25
    $region24: #{tpu_custom_call.1} parent=1 // pred_region
      _
    $region25: #{tpu_custom_call.1} parent=1 // pred_fallthru
      _
    // Predicated region
    $region26: #{tpu_custom_call.1} parent=1 // pred_check
      _
    $region27: #{tpu_custom_call.1} parent=1 // pred_check_branch
      %29 = sbr.rel (0) target = $region29
    $region28: #{tpu_custom_call.1} parent=1 // pred_region
      _
    $region29: #{tpu_custom_call.1} parent=1 // pred_fallthru
      _
    // Predicated region
    $region30: #{tpu_custom_call.1} parent=1 // pred_check
      _
    $region31: #{tpu_custom_call.1} parent=1 // pred_check_branch
      %31 = sbr.rel (0) target = $region33
    $region32: #{tpu_custom_call.1} parent=1 // pred_region
      _
    $region33: #{tpu_custom_call.1} parent=1 // pred_fallthru
      _
    %v32 = vld [vmem:[%s0] sm:$0x3]
    %v33 = vld [vmem:[%s1] sm:$0xff]
    %v34 = vld [vmem:[%s1 + $0x8] sm:$0xff]
    %36 = vset.pattern.permute.xlu0 0
    %37 = vperm.xlu0 %36, %v33
    %v38 = vpop.permute.xlu0 %37
    %41 = vset.pattern.permute.xlu0 0
    %42 = vperm.xlu0 %41, %v34
    %v43 = vpop.permute.xlu0 %42
    %v45 = vlaneseq
    %v46 = vshrl.u32 %v45, 7
    %v47 = vsub.s32 0, %v46
    %v48 = vrot.slane %v32, %v47
    %v49 = vmul.f32 %v38, %v48
    %v50 = vmul.f32 %v43, %v48
    %51 = vset.pattern.permute.xlu0 1
    %52 = vperm.xlu0 %51, %v33
    %v53 = vpop.permute.xlu0 %52
    %55 = vset.pattern.permute.xlu0 1
    %56 = vperm.xlu0 %55, %v34
    %v57 = vpop.permute.xlu0 %56
    %v59 = vlaneseq
    %v60 = vshrl.u32 %v59, 7
    %v61 = vsub.s32 1, %v60
    %v62 = vrot.slane %v32, %v61
    %v63 = vmul.f32 %v53, %v62
    %v64 = vmul.f32 %v57, %v62
    %v65 = vadd.f32 %v49, %v63
    %v66 = vadd.f32 %v50, %v64
    %v67 = vld [vmem:[%s2] sm:$0xff]
    %v68 = vld [vmem:[%s2 + $0x8] sm:$0xff]
    %70 = vset.pattern.permute.xlu0 0
    %71 = vperm.xlu0 %70, %v67
    %v72 = vpop.permute.xlu0 %71
    %75 = vset.pattern.permute.xlu0 0
    %76 = vperm.xlu0 %75, %v68
    %v77 = vpop.permute.xlu0 %76
    %v79 = vadd.f32 %v65, %v72
    %v80 = vadd.f32 %v66, %v77
    %v81 = vmax.f32 %v79, 0.0
    %v82 = vmax.f32 %v80, 0.0
    %v83 = vld [vmem:[%s3] sm:$0xff]
    %v84 = vld [vmem:[%s3 + $0x8] sm:$0xff]
    %v85 = vld [vmem:[%s4] sm:$0xff]
    %v86 = vld [vmem:[%s4 + $0x8] sm:$0xff]
    %88 = vset.pattern.permute.xlu0 0
    %89 = vperm.xlu0 %88, %v85
    %v90 = vpop.permute.xlu0 %89
    %93 = vset.pattern.permute.xlu0 0
    %94 = vperm.xlu0 %93, %v86
    %v95 = vpop.permute.xlu0 %94
    %vm97 = vcmask 130048
    %v99 = vsel %vm97, %v83, 0
    %v102 = vsel %vm97, %v84, 0
    %104 = vmatprep.subr.mxu0 0.0
    %105 = vmatpush1.msra.mxu0 0.0
    %106 = vmatprep.subr.mxu0 0.0
    %107 = vmatpush1.msra.mxu0 0.0
    %108 = vmatprep.subr.mxu0 0.0
    %109 = vmatpush1.msra.mxu0 0.0
    %110 = vmatprep.subr.mxu0 0.0
    %111 = vmatpush1.msra.mxu0 0.0
    %112 = vmatprep.subr.mxu0 0.0
    %113 = vmatpush1.msra.mxu0 0.0
    %114 = vmatprep.subr.mxu0 0.0
    %115 = vmatpush1.msra.mxu0 0.0
    %116 = vmatprep.subr.mxu0 0.0
    %117 = vmatpush1.msra.mxu0 0.0
    %118 = vmatprep.subr.mxu0 0.0
    %119 = vmatpush1.msra.mxu0 0.0
    %120 = vmatprep.subr.mxu0 0.0
    %121 = vmatpush1.msra.mxu0 0.0
    %122 = vmatprep.subr.mxu0 0.0
    %123 = vmatpush1.msra.mxu0 0.0
    %124 = vmatprep.subr.mxu0 0.0
    %125 = vmatpush1.msra.mxu0 0.0
    %126 = vmatprep.subr.mxu0 0.0
    %127 = vmatpush1.msra.mxu0 0.0
    %128 = vmatprep.subr.mxu0 0.0
    %129 = vmatpush1.msra.mxu0 0.0
    %130 = vmatprep.subr.mxu0 0.0
    %131 = vmatpush1.msra.mxu0 0.0
    %132 = vmatprep.subr.mxu0 0.0
    %133 = vmatpush1.msra.mxu0 %v82
    %134 = vmatprep.subr.mxu0 0.0
    %135 = vmatpush1.msra.mxu0 %v81
    %136 = vmatprep.subr.mxu0 0.0
    %137 = vmatpush2.msra.mxu0 0.0
    %138 = vmatprep.subr.mxu0 0.0
    %139 = vmatpush2.msra.mxu0 0.0
    %140 = vmatprep.subr.mxu0 0.0
    %141 = vmatpush2.msra.mxu0 0.0
    %142 = vmatprep.subr.mxu0 0.0
    %143 = vmatpush2.msra.mxu0 0.0
    %144 = vmatprep.subr.mxu0 0.0
    %145 = vmatpush2.msra.mxu0 0.0
    %146 = vmatprep.subr.mxu0 0.0
    %147 = vmatpush2.msra.mxu0 0.0
    %148 = vmatprep.subr.mxu0 0.0
    %149 = vmatpush2.msra.mxu0 0.0
    %150 = vmatprep.subr.mxu0 0.0
    %151 = vmatpush2.msra.mxu0 0.0
    %152 = vmatprep.subr.mxu0 0.0
    %153 = vmatpush2.msra.mxu0 0.0
    %154 = vmatprep.subr.mxu0 0.0
    %155 = vmatpush2.msra.mxu0 0.0
    %156 = vmatprep.subr.mxu0 0.0
    %157 = vmatpush2.msra.mxu0 0.0
    %158 = vmatprep.subr.mxu0 0.0
    %159 = vmatpush2.msra.mxu0 0.0
    %160 = vmatprep.subr.mxu0 0.0
    %161 = vmatpush2.msra.mxu0 0.0
    %162 = vmatprep.subr.mxu0 0.0
    %163 = vmatpush2.msra.mxu0 0.0
    %164 = vmatprep.subr.mxu0 0.0
    %165 = vmatpush2.msra.mxu0 0.0
    %166 = vmatprep.subr.mxu0 0.0
    %167 = vmatpush2.msra.mxu0 0.0
    %168 = vmatprep.mubr.f32.mxu0 0.0
    %169 = vmatmul.mubr.f32.gmra.mxu0 %v99
    %v170 = vpop.f32.mrf.mxu0
    %v171 = vadd.f32 %v90, %v170
    %v172 = vpop.f32.mrf.mxu0
    %173 = vmatprep.mubr.f32.mxu0 0.0
    %174 = vmatmul.mubr.f32.gmra.mxu0 %v102
    %v175 = vpop.f32.mrf.mxu0
    %v176 = vadd.f32 %v95, %v175
    %v177 = vpop.f32.mrf.mxu0
    %178 = vdwg.mxu0
    %v179 = vmax.f32 %v171, 0.0
    %v180 = vmax.f32 %v176, 0.0
    %v181 = vld [vmem:[%s5] sm:$0xff]
    %v182 = vld [vmem:[%s5 + $0x8] sm:$0xff]
    %184 = vset.pattern.permute.xlu0 0
    %185 = vperm.xlu0 %184, %v181
    %v186 = vpop.permute.xlu0 %185
    %189 = vset.pattern.permute.xlu0 0
    %190 = vperm.xlu0 %189, %v182
    %v191 = vpop.permute.xlu0 %190
    %v193 = vmul.f32 %v186, %v179
    %v194 = vmul.f32 %v191, %v180
    %v195 = vadd.f32 %v193, %v194
    %v196 = vrot.slane %v195, 4
    %v197 = vadd.f32 %v195, %v196
    %v198 = vrot.slane %v197, 2
    %v199 = vadd.f32 %v197, %v198
    %v200 = vrot.slane %v199, 1
    %v201 = vadd.f32 %v199, %v200
    %v202 = vld [vmem:[#allocation2] sm:$0x1]
    %204 = vset.pattern.permute.xlu0 0
    %205 = vperm.xlu0 %204, %v202
    %v206 = vpop.permute.xlu0 %205
    %v208 = vlaneseq
    %v209 = vshrl.u32 %v208, 7
    %v210 = vsub.s32 0, %v209
    %v211 = vrot.slane %v206, %v210
    %v212 = vadd.f32 %v201, %v211
    %v213 = vsub.f32 0.0, %v212
    %v214 = vmul.f32 %v213, 1.442695
    %v215 = vpow.pop %v214
    %v216 = vadd.f32 %v215, 1.0
    %v217 = vrcp.pop %v216
    %218 = vst [vmem:[#allocation3] sm:$0x1] %v217
    // Predicated region
    $region34: #{tpu_custom_call.1} parent=1 // pred_check
      _
    $region35: #{tpu_custom_call.1} parent=1 // pred_check_branch
      %220 = sbr.rel (0) target = $region37
    $region36: #{tpu_custom_call.1} parent=1 // pred_region
      %s222 = ssub.s32 16, 16
      %223 = vsyncadd [#allocation4], %s222
      %s225 = sshll.u32 [#allocation3], 4
      %s226 = int_to_ptr.vmem [resolvable:$true] %s225
      %228 = dma.vmem_to_hbm [thread:$0]  %s226, 16, %s8, [#allocation4]
    $region37: #{tpu_custom_call.1} parent=1 // pred_fallthru
      _
    // Predicated region
    $region38: #{tpu_custom_call.1} parent=1 // pred_check
      _
    $region39: #{tpu_custom_call.1} parent=1 // pred_check_branch
      %230 = sbr.rel (0) target = $region41
    $region40: #{tpu_custom_call.1} parent=1 // pred_region
      %231 = dma.done [#allocation4], 16
    $region41: #{tpu_custom_call.1} parent=1 // pred_fallthru
      _
    %232 = vsyncpa [#allocation4], 1

</llo_original>
